<compile_context>
chip_gen: v7x
topology: tpu7x:2x2x1
jax: 0.10.0
libtpu: 0.0.40
codegen_flags: <defaults>
</compile_context>

<pallas_src>
import functools

import jax
import jax.numpy as jnp
from jax.experimental import pallas as pl
from jax.experimental.pallas import tpu as pltpu


# Below this element count (512 KiB of f32) the fused-XLA fast path wins over a
# pallas_call + its fixed launch overhead.
_FAST_PATH_MIN_ELEMS = 128 * 1024


def _mask_reference(iou, threshold):
    """Pure-JAX positive mask (small-problem fast path + correctness reference).

    Supports an optional leading batch axis: iou is [..., R, C].
    """
    forced_row = jnp.argmax(iou, axis=-2)  # first occurrence, like torch.argmax
    row_ids = jax.lax.broadcasted_iota(jnp.int32, iou.shape, iou.ndim - 2)
    return (iou > threshold) | (row_ids == forced_row[..., None, :])


def _matcher_kernel(iou_ref, mask_ref, *, threshold):
    """positive_mask = (iou > threshold) OR (row == first-argmax of its column).

    Block layout (1, R, tc): the full prediction axis (R) on sublanes, a tile
    of the gt axis on lanes.  Columns are independent, so gt-axis tiling needs
    no cross-tile carry and ragged last tiles are safe (their lanes hold junk
    that Pallas never commits to HBM).
    """
    cost = iou_ref[0]                                        # (R, tc) f32
    r, tc = cost.shape
    row_ids = jax.lax.broadcasted_iota(jnp.int32, (r, tc), 0)

    # First-occurrence argmax down each column: two exact XLU reductions
    # (max, then min row index among ties).  The kernel is DMA/overhead-bound,
    # so no packed single-pass argmax (tie-break risk for zero win).
    # NaN note: unlike torch.argmax, a NaN column yields no forced positive
    # (irrelevant for IoU-like inputs).
    col_max = jnp.max(cost, axis=0, keepdims=True)           # (1, tc)
    first_max_row = jnp.min(
        jnp.where(cost == col_max, row_ids, jnp.int32(r)),
        axis=0, keepdims=True)                               # (1, tc)

    forced = row_ids == first_max_row
    mask_ref[0] = ((cost > jnp.float32(threshold)) | forced).astype(jnp.int8)


def _choose_gt_tile(num_preds, num_gt):
    """Lane tile over the gt axis.

    Target ~8 MiB of double-buffered (f32 in + int8 out) per tile: near HBM
    roofline, and safe under the 32 MiB scoped default / v7x's 64 MiB physical
    VMEM on every generation.  If the whole gt axis fits, use a single
    full-dim tile (no 128-divisibility constraint, no extra grid steps).
    """
    budget = 8 * 1024 * 1024
    per_col = 2 * (4 + 1) * max(num_preds, 1)   # dbl-buffered in+out bytes / gt column
    cap = max(128, (budget // per_col) // 128 * 128)
    if num_gt <= cap:
        return num_gt
    return cap


def positive_mask(iou, threshold=0.3, *, use_pallas=None, gt_tile=None):
    """int8 positive mask for iou of shape [R, C] or [B, R, C]."""
    iou = jnp.asarray(iou, jnp.float32)
    if iou.ndim == 2:
        return positive_mask(iou[None], threshold,
                             use_pallas=use_pallas, gt_tile=gt_tile)[0]
    assert iou.ndim == 3, "expected [R, C] or [B, R, C]"
    B, R, C = iou.shape

    if use_pallas is None:
        use_pallas = iou.size >= _FAST_PATH_MIN_ELEMS
    if not use_pallas:
        return _mask_reference(iou, threshold).astype(jnp.int8)

    tc = gt_tile if gt_tile is not None else _choose_gt_tile(R, C)
    n_ct = pl.cdiv(C, tc)

    block_bytes = R * tc * (4 + 1)               # f32 in + int8 out, one tile
    vmem_limit = int(min(64 * 1024 * 1024,
                         max(16 * 1024 * 1024, 3 * block_bytes)))
    # TODO(synk): for pathological num_preds (one (R, tc) tile >> 8 MiB) add a
    # second reduction grid axis over R with running col-max / first-argmax
    # scratch instead of keeping the full prediction axis in one block.

    return pl.pallas_call(
        functools.partial(_matcher_kernel, threshold=float(threshold)),
        out_shape=jax.ShapeDtypeStruct((B, R, C), jnp.int8),
        grid=(B, n_ct),
        in_specs=[pl.BlockSpec((1, R, tc), lambda b, j: (b, 0, j))],
        out_specs=pl.BlockSpec((1, R, tc), lambda b, j: (b, 0, j)),
        compiler_params=pltpu.CompilerParams(
            dimension_semantics=("parallel", "parallel"),
            vmem_limit_bytes=vmem_limit,
        ),
    )(iou)


def threshold_matcher(iou, threshold=0.3, max_matches=None, *, use_pallas=None):
    """JAX/Pallas equivalent of ThresholdMatcher.forward for one [R, C] iou.

    Returns (cost, row_ind, col_ind).  TPU requires static shapes, so
    row_ind/col_ind are padded with -1 up to `max_matches`; valid pairs come
    first, in the same row-major order as torch's nonzero(as_tuple=True).

    Truncation contract: the default cap is max(4*C, 256) (NOT R*C).  If the
    true number of positives exceeds the cap, the result is silently
    truncated; pass a larger max_matches (up to R*C) to get them all.
    """
    iou = jnp.asarray(iou, jnp.float32)
    R, C = iou.shape
    mask = positive_mask(iou, threshold, use_pallas=use_pallas)
    if max_matches is None:
        max_matches = min(R * C, max(4 * C, 256))
    row_ind, col_ind = jnp.nonzero(mask, size=max_matches, fill_value=-1)
    return iou, row_ind, col_ind


if __name__ == "__main__":
    key = jax.random.PRNGKey(0)
    R, C = 300, 72  # num_predictions x num_gt (DETR-ish, small)
    iou = jax.random.uniform(key, (R, C), dtype=jnp.float32)
    cap = 1024

    # 1) Pallas path (forced; the auto path would take the small-problem fast path).
    cost, row_ind, col_ind = threshold_matcher(iou, 0.3, max_matches=cap,
                                               use_pallas=True)
    jax.block_until_ready((cost, row_ind, col_ind))

    ref_mask = _mask_reference(iou, 0.3)
    ref_row, ref_col = jnp.nonzero(ref_mask, size=cap, fill_value=-1)
    assert jnp.array_equal(cost, iou)
    assert jnp.array_equal(row_ind, ref_row)
    assert jnp.array_equal(col_ind, ref_col)

    # 2) Auto path (small problem -> fused-XLA fast path) gives the same answer.
    _, row_a, col_a = threshold_matcher(iou, 0.3, max_matches=cap)
    assert jnp.array_equal(row_a, ref_row)
    assert jnp.array_equal(col_a, ref_col)

    # 3) Batched masks in one pallas_call, including a ragged gt tile
    #    (C=200 with gt_tile=128 -> second block is partially out of bounds).
    iou_b = jax.random.uniform(jax.random.PRNGKey(1), (2, 64, 200),
                               dtype=jnp.float32)
    mask_b = positive_mask(iou_b, 0.3, use_pallas=True, gt_tile=128)
    jax.block_until_ready(mask_b)
    assert jnp.array_equal(mask_b.astype(bool), _mask_reference(iou_b, 0.3))

    print("KERNEL_OK")
</pallas_src>

<mosaic_0001>
module attributes {stable_mosaic.version = 11 : i64} {
  func.func @_matcher_kernel(%arg0: i32, %arg1: i32, %arg2: memref<1x300x72xf32, #tpu.memory_space<vmem>>, %arg3: memref<1x300x72xi8, #tpu.memory_space<vmem>>) attributes {dimension_semantics = [#tpu.dimension_semantics<parallel>, #tpu.dimension_semantics<parallel>], iteration_bounds = array<i64: 1, 1>, scalar_prefetch = 0 : i64, scratch_operands = 0 : i64, tpu.core_type = #tpu.core_type<tc>, window_params = [{transform_indices = @transform_0, window_bounds = array<i64: 1, 300, 72>}, {transform_indices = @transform_1, window_bounds = array<i64: 1, 300, 72>}]} {
    %c0 = arith.constant 0 : index
    %c0_0 = arith.constant 0 : index
    %c0_1 = arith.constant 0 : index
    %0 = vector.load %arg2[%c0, %c0_0, %c0_1] : memref<1x300x72xf32, #tpu.memory_space<vmem>>, vector<1x300x72xf32>
    %1 = vector.shape_cast %0 : vector<1x300x72xf32> to vector<300x72xf32>
    %2 = tpu.iota {dimensions = array<i32: 0>} : vector<300x72xi32>
    %cst = arith.constant dense<0xFF800000> : vector<72xf32>
    %3 = vector.multi_reduction <maximumf>, %1, %cst [0] : vector<300x72xf32> to vector<72xf32>
    %4 = vector.shape_cast %3 : vector<72xf32> to vector<1x72xf32>
    %5 = vector.broadcast %4 : vector<1x72xf32> to vector<300x72xf32>
    %6 = arith.cmpf oeq, %1, %5 : vector<300x72xf32>
    %c300_i32 = arith.constant 300 : i32
    %7 = vector.broadcast %c300_i32 : i32 to vector<300x72xi32>
    %8 = arith.select %6, %2, %7 : vector<300x72xi1>, vector<300x72xi32>
    %cst_2 = arith.constant dense<2147483647> : vector<72xi32>
    %9 = vector.multi_reduction <minsi>, %8, %cst_2 [0] : vector<300x72xi32> to vector<72xi32>
    %10 = vector.shape_cast %9 : vector<72xi32> to vector<1x72xi32>
    %11 = vector.broadcast %10 : vector<1x72xi32> to vector<300x72xi32>
    %12 = arith.cmpi eq, %2, %11 : vector<300x72xi32>
    %cst_3 = arith.constant 3.000000e-01 : f32
    %13 = vector.broadcast %cst_3 : f32 to vector<300x72xf32>
    %14 = arith.cmpf ogt, %1, %13 : vector<300x72xf32>
    %15 = arith.ori %14, %12 : vector<300x72xi1>
    %16 = arith.extui %15 : vector<300x72xi1> to vector<300x72xi8>
    %c0_4 = arith.constant 0 : index
    %c0_5 = arith.constant 0 : index
    %c0_6 = arith.constant 0 : index
    %17 = vector.load %arg3[%c0_4, %c0_5, %c0_6] : memref<1x300x72xi8, #tpu.memory_space<vmem>>, vector<1x300x72xi8>
    %18 = vector.shape_cast %17 : vector<1x300x72xi8> to vector<300x72xi8>
    %19 = vector.shape_cast %16 : vector<300x72xi8> to vector<1x300x72xi8>
    tpu.vector_store %arg3[%c0_4, %c0_5, %c0_6], %19 {strides = array<i32>} : memref<1x300x72xi8, #tpu.memory_space<vmem>>, vector<1x300x72xi8>,
    return
  }
  func.func @transform_0(%arg0: i32, %arg1: i32) -> (i32, i32, i32) {
    %c0_i32 = arith.constant 0 : i32
    %c0_i32_0 = arith.constant 0 : i32
    return %arg0, %c0_i32, %arg1 : i32, i32, i32
  }
  func.func @transform_1(%arg0: i32, %arg1: i32) -> (i32, i32, i32) {
    %c0_i32 = arith.constant 0 : i32
    %c0_i32_0 = arith.constant 0 : i32
    return %arg0, %c0_i32, %arg1 : i32, i32, i32
  }
}

</mosaic_0001>

<llo_original>
// kernel: tpu_custom_call.1
$region0: #{tpu_custom_call.1}
  #allocation0 [shape = 'u32[]', space=smem, size = 0x4, offset = 0x4, fixed_abs, tag = 'smem constant byte address 0x4 - core index']
  #allocation1 [shape = 'u32[144,128]{1,0:T(1,128)}', space=vmem, size = 0x12000, scoped, tag = 'internal scratch']
  %s0 = inlined_call_operand.vmem [shape: f32[1,300,72], index: 0, kind: input, shape index: {}]
  %s1 = inlined_call_operand.vmem [shape: s8[1,300,72], index: 1, kind: output, shape index: {}]
  %s2 = sld [smem:[#allocation0]]
  $region14: #{tpu_custom_call.1} parent=0
    _
  %s4 = ssub.s32 1, %s2
  %s5 = scalar_select 0, %s4, %s2
  // Predicated region
  $region2: #{tpu_custom_call.1} parent=0 // pred_check
    _
  $region3: #{tpu_custom_call.1} parent=0 // pred_check_branch
    %7 = sbr.rel (0) target = $region5
  $region4: #{tpu_custom_call.1} parent=0 // pred_region
    _
  $region5: #{tpu_custom_call.1} parent=0 // pred_fallthru
    _
  %v10 = vld [vmem:[%s0] sm:$0xff]
  %v11 = vld [vmem:[%s0 + $0x8] sm:$0xff]
  %v12 = vld [vmem:[%s0 + $0x10] sm:$0xff]
  %v13 = vld [vmem:[%s0 + $0x18] sm:$0xff]
  %v14 = vld [vmem:[%s0 + $0x20] sm:$0xff]
  %v15 = vld [vmem:[%s0 + $0x28] sm:$0xff]
  %v16 = vld [vmem:[%s0 + $0x30] sm:$0xff]
  %v17 = vld [vmem:[%s0 + $0x38] sm:$0xff]
  %v18 = vld [vmem:[%s0 + $0x40] sm:$0xff]
  %v19 = vld [vmem:[%s0 + $0x48] sm:$0xff]
  %v20 = vld [vmem:[%s0 + $0x50] sm:$0xff]
  %v21 = vld [vmem:[%s0 + $0x58] sm:$0xff]
  %v22 = vld [vmem:[%s0 + $0x60] sm:$0xff]
  %v23 = vld [vmem:[%s0 + $0x68] sm:$0xff]
  %v24 = vld [vmem:[%s0 + $0x70] sm:$0xff]
  %v25 = vld [vmem:[%s0 + $0x78] sm:$0xff]
  %v26 = vld [vmem:[%s0 + $0x80] sm:$0xff]
  %v27 = vld [vmem:[%s0 + $0x88] sm:$0xff]
  %v28 = vld [vmem:[%s0 + $0x90] sm:$0xff]
  %v29 = vld [vmem:[%s0 + $0x98] sm:$0xff]
  %v30 = vld [vmem:[%s0 + $0xa0] sm:$0xff]
  %v31 = vld [vmem:[%s0 + $0xa8] sm:$0xff]
  %v32 = vld [vmem:[%s0 + $0xb0] sm:$0xff]
  %v33 = vld [vmem:[%s0 + $0xb8] sm:$0xff]
  %v34 = vld [vmem:[%s0 + $0xc0] sm:$0xff]
  %v35 = vld [vmem:[%s0 + $0xc8] sm:$0xff]
  %v36 = vld [vmem:[%s0 + $0xd0] sm:$0xff]
  %v37 = vld [vmem:[%s0 + $0xd8] sm:$0xff]
  %v38 = vld [vmem:[%s0 + $0xe0] sm:$0xff]
  %v39 = vld [vmem:[%s0 + $0xe8] sm:$0xff]
  %v40 = vld [vmem:[%s0 + $0xf0] sm:$0xff]
  %v41 = vld [vmem:[%s0 + $0xf8] sm:$0xff]
  %v42 = vld [vmem:[%s0 + $0x100] sm:$0xff]
  %v43 = vld [vmem:[%s0 + $0x108] sm:$0xff]
  %v44 = vld [vmem:[%s0 + $0x110] sm:$0xff]
  %v45 = vld [vmem:[%s0 + $0x118] sm:$0xff]
  %v46 = vld [vmem:[%s0 + $0x120] sm:$0xff]
  %v47 = vld [vmem:[%s0 + $0x128] sm:$0xf]
  %v48 = vlaneseq
  %v49 = vshrl.u32 %v48, 7
  %v50 = vadd.s32 %v49, 8
  %v51 = vadd.s32 %v49, 16
  %v52 = vadd.s32 %v49, 24
  %v53 = vadd.s32 %v49, 32
  %v54 = vadd.s32 %v49, 40
  %v55 = vadd.s32 %v49, 48
  %v56 = vadd.s32 %v49, 56
  %v57 = vadd.s32 %v49, 64
  %v58 = vadd.s32 %v49, 72
  %v59 = vadd.s32 %v49, 80
  %v60 = vadd.s32 %v49, 88
  %v61 = vadd.s32 %v49, 96
  %v62 = vadd.s32 %v49, 104
  %v63 = vadd.s32 %v49, 112
  %v64 = vadd.s32 %v49, 120
  %v65 = vadd.s32 %v49, 128
  %v66 = vadd.s32 %v49, 136
  %v67 = vadd.s32 %v49, 144
  %v68 = vadd.s32 %v49, 152
  %v69 = vadd.s32 %v49, 160
  %v70 = vadd.s32 %v49, 168
  %v71 = vadd.s32 %v49, 176
  %v72 = vadd.s32 %v49, 184
  %v73 = vadd.s32 %v49, 192
  %v74 = vadd.s32 %v49, 200
  %v75 = vadd.s32 %v49, 208
  %v76 = vadd.s32 %v49, 216
  %v77 = vadd.s32 %v49, 224
  %v78 = vadd.s32 %v49, 232
  %v79 = vadd.s32 %v49, 240
  %v80 = vadd.s32 %v49, 248
  %v81 = vadd.s32 %v49, 256
  %v82 = vadd.s32 %v49, 264
  %v83 = vadd.s32 %v49, 272
  %v84 = vadd.s32 %v49, 280
  %v85 = vadd.s32 %v49, 288
  %v86 = vadd.s32 %v49, 296
  %vm87 = vcmask 588800
  %v88 = vsel %vm87, %v10, -inf
  %v89 = vsel %vm87, %v11, -inf
  %v90 = vsel %vm87, %v12, -inf
  %v91 = vsel %vm87, %v13, -inf
  %v92 = vsel %vm87, %v14, -inf
  %v93 = vmax.f32 %v88, %v92
  %v94 = vsel %vm87, %v15, -inf
  %v95 = vmax.f32 %v89, %v94
  %v96 = vsel %vm87, %v16, -inf
  %v97 = vmax.f32 %v90, %v96
  %v98 = vsel %vm87, %v17, -inf
  %v99 = vmax.f32 %v91, %v98
  %v100 = vsel %vm87, %v18, -inf
  %v101 = vmax.f32 %v93, %v100
  %v102 = vsel %vm87, %v19, -inf
  %v103 = vmax.f32 %v95, %v102
  %v104 = vsel %vm87, %v20, -inf
  %v105 = vmax.f32 %v97, %v104
  %v106 = vsel %vm87, %v21, -inf
  %v107 = vmax.f32 %v99, %v106
  %v108 = vsel %vm87, %v22, -inf
  %v109 = vmax.f32 %v101, %v108
  %v110 = vsel %vm87, %v23, -inf
  %v111 = vmax.f32 %v103, %v110
  %v112 = vsel %vm87, %v24, -inf
  %v113 = vmax.f32 %v105, %v112
  %v114 = vsel %vm87, %v25, -inf
  %v115 = vmax.f32 %v107, %v114
  %v116 = vsel %vm87, %v26, -inf
  %v117 = vmax.f32 %v109, %v116
  %v118 = vsel %vm87, %v27, -inf
  %v119 = vmax.f32 %v111, %v118
  %v120 = vsel %vm87, %v28, -inf
  %v121 = vmax.f32 %v113, %v120
  %v122 = vsel %vm87, %v29, -inf
  %v123 = vmax.f32 %v115, %v122
  %v124 = vsel %vm87, %v30, -inf
  %v125 = vmax.f32 %v117, %v124
  %v126 = vsel %vm87, %v31, -inf
  %v127 = vmax.f32 %v119, %v126
  %v128 = vsel %vm87, %v32, -inf
  %v129 = vmax.f32 %v121, %v128
  %v130 = vsel %vm87, %v33, -inf
  %v131 = vmax.f32 %v123, %v130
  %v132 = vsel %vm87, %v34, -inf
  %v133 = vmax.f32 %v125, %v132
  %v134 = vsel %vm87, %v35, -inf
  %v135 = vmax.f32 %v127, %v134
  %v136 = vsel %vm87, %v36, -inf
  %v137 = vmax.f32 %v129, %v136
  %v138 = vsel %vm87, %v37, -inf
  %v139 = vmax.f32 %v131, %v138
  %v140 = vsel %vm87, %v38, -inf
  %v141 = vmax.f32 %v133, %v140
  %v142 = vsel %vm87, %v39, -inf
  %v143 = vmax.f32 %v135, %v142
  %v144 = vsel %vm87, %v40, -inf
  %v145 = vmax.f32 %v137, %v144
  %v146 = vsel %vm87, %v41, -inf
  %v147 = vmax.f32 %v139, %v146
  %v148 = vsel %vm87, %v42, -inf
  %v149 = vmax.f32 %v141, %v148
  %v150 = vsel %vm87, %v43, -inf
  %v151 = vmax.f32 %v143, %v150
  %v152 = vsel %vm87, %v44, -inf
  %v153 = vmax.f32 %v145, %v152
  %v154 = vsel %vm87, %v45, -inf
  %v155 = vmax.f32 %v147, %v154
  %v156 = vsel %vm87, %v46, -inf
  %v157 = vmax.f32 %v149, %v156
  %vm158 = vcmask 584704
  %v159 = vsel %vm158, %v47, -inf
  %v160 = vmax.f32 %v151, %v159
  %v161 = vmax.f32 %v157, %v160
  %v162 = vmax.f32 %v153, %v155
  %v163 = vmax.f32 %v161, %v162
  %v164 = vrot.slane %v163, 4
  %v165 = vmax.f32 %v163, %v164
  %v166 = vrot.slane %v165, 2
  %v167 = vmax.f32 %v165, %v166
  %v168 = vrot.slane %v167, 1
  %v169 = vmax.f32 %v167, %v168
  %vm170 = vcmp.eq.f32.partialorder %v10, %v169
  %vm171 = vcmp.eq.f32.partialorder %v11, %v169
  %vm172 = vcmp.eq.f32.partialorder %v12, %v169
  %vm173 = vcmp.eq.f32.partialorder %v13, %v169
  %vm174 = vcmp.eq.f32.partialorder %v14, %v169
  %vm175 = vcmp.eq.f32.partialorder %v15, %v169
  %vm176 = vcmp.eq.f32.partialorder %v16, %v169
  %vm177 = vcmp.eq.f32.partialorder %v17, %v169
  %vm178 = vcmp.eq.f32.partialorder %v18, %v169
  %vm179 = vcmp.eq.f32.partialorder %v19, %v169
  %vm180 = vcmp.eq.f32.partialorder %v20, %v169
  %vm181 = vcmp.eq.f32.partialorder %v21, %v169
  %vm182 = vcmp.eq.f32.partialorder %v22, %v169
  %vm183 = vcmp.eq.f32.partialorder %v23, %v169
  %vm184 = vcmp.eq.f32.partialorder %v24, %v169
  %vm185 = vcmp.eq.f32.partialorder %v25, %v169
  %vm186 = vcmp.eq.f32.partialorder %v26, %v169
  %vm187 = vcmp.eq.f32.partialorder %v27, %v169
  %vm188 = vcmp.eq.f32.partialorder %v28, %v169
  %vm189 = vcmp.eq.f32.partialorder %v29, %v169
  %vm190 = vcmp.eq.f32.partialorder %v30, %v169
  %vm191 = vcmp.eq.f32.partialorder %v31, %v169
  %vm192 = vcmp.eq.f32.partialorder %v32, %v169
  %vm193 = vcmp.eq.f32.partialorder %v33, %v169
  %vm194 = vcmp.eq.f32.partialorder %v34, %v169
  %vm195 = vcmp.eq.f32.partialorder %v35, %v169
  %vm196 = vcmp.eq.f32.partialorder %v36, %v169
  %vm197 = vcmp.eq.f32.partialorder %v37, %v169
  %vm198 = vcmp.eq.f32.partialorder %v38, %v169
  %vm199 = vcmp.eq.f32.partialorder %v39, %v169
  %vm200 = vcmp.eq.f32.partialorder %v40, %v169
  %vm201 = vcmp.eq.f32.partialorder %v41, %v169
  %vm202 = vcmp.eq.f32.partialorder %v42, %v169
  %vm203 = vcmp.eq.f32.partialorder %v43, %v169
  %vm204 = vcmp.eq.f32.partialorder %v44, %v169
  %vm205 = vcmp.eq.f32.partialorder %v45, %v169
  %vm206 = vcmp.eq.f32.partialorder %v46, %v169
  %vm207 = vcmp.eq.f32.partialorder %v47, %v169
  %v208 = vsel %vm170, %v49, 300
  %v209 = vsel %vm171, %v50, 300
  %v210 = vsel %vm172, %v51, 300
  %v211 = vsel %vm173, %v52, 300
  %v212 = vsel %vm174, %v53, 300
  %v213 = vsel %vm175, %v54, 300
  %v214 = vsel %vm176, %v55, 300
  %v215 = vsel %vm177, %v56, 300
  %v216 = vsel %vm178, %v57, 300
  %v217 = vsel %vm179, %v58, 300
  %v218 = vsel %vm180, %v59, 300
  %v219 = vsel %vm181, %v60, 300
  %v220 = vsel %vm182, %v61, 300
  %v221 = vsel %vm183, %v62, 300
  %v222 = vsel %vm184, %v63, 300
  %v223 = vsel %vm185, %v64, 300
  %v224 = vsel %vm186, %v65, 300
  %v225 = vsel %vm187, %v66, 300
  %v226 = vsel %vm188, %v67, 300
  %v227 = vsel %vm189, %v68, 300
  %v228 = vsel %vm190, %v69, 300
  %v229 = vsel %vm191, %v70, 300
  %v230 = vsel %vm192, %v71, 300
  %v231 = vsel %vm193, %v72, 300
  %v232 = vsel %vm194, %v73, 300
  %v233 = vsel %vm195, %v74, 300
  %v234 = vsel %vm196, %v75, 300
  %v235 = vsel %vm197, %v76, 300
  %v236 = vsel %vm198, %v77, 300
  %v237 = vsel %vm199, %v78, 300
  %v238 = vsel %vm200, %v79, 300
  %v239 = vsel %vm201, %v80, 300
  %v240 = vsel %vm202, %v81, 300
  %v241 = vsel %vm203, %v82, 300
  %v242 = vsel %vm204, %v83, 300
  %v243 = vsel %vm205, %v84, 300
  %v244 = vsel %vm206, %v85, 300
  %v245 = vsel %vm207, %v86, 300
  %v246 = vsel %vm87, %v208, 2147483647
  %v247 = vsel %vm87, %v209, 2147483647
  %v248 = vsel %vm87, %v210, 2147483647
  %v249 = vsel %vm87, %v211, 2147483647
  %v250 = vsel %vm87, %v212, 2147483647
  %vm251 = vcmp.lt.s32.totalorder %v246, %v250
  %v252 = vsel %vm251, %v246, %v250
  %v253 = vsel %vm87, %v213, 2147483647
  %vm254 = vcmp.lt.s32.totalorder %v247, %v253
  %v255 = vsel %vm254, %v247, %v253
  %v256 = vsel %vm87, %v214, 2147483647
  %vm257 = vcmp.lt.s32.totalorder %v248, %v256
  %v258 = vsel %vm257, %v248, %v256
  %v259 = vsel %vm87, %v215, 2147483647
  %vm260 = vcmp.lt.s32.totalorder %v249, %v259
  %v261 = vsel %vm260, %v249, %v259
  %v262 = vsel %vm87, %v216, 2147483647
  %vm263 = vcmp.lt.s32.totalorder %v252, %v262
  %v264 = vsel %vm263, %v252, %v262
  %v265 = vsel %vm87, %v217, 2147483647
  %vm266 = vcmp.lt.s32.totalorder %v255, %v265
  %v267 = vsel %vm266, %v255, %v265
  %v268 = vsel %vm87, %v218, 2147483647
  %vm269 = vcmp.lt.s32.totalorder %v258, %v268
  %v270 = vsel %vm269, %v258, %v268
  %v271 = vsel %vm87, %v219, 2147483647
  %vm272 = vcmp.lt.s32.totalorder %v261, %v271
  %v273 = vsel %vm272, %v261, %v271
  %v274 = vsel %vm87, %v220, 2147483647
  %vm275 = vcmp.lt.s32.totalorder %v264, %v274
  %v276 = vsel %vm275, %v264, %v274
  %v277 = vsel %vm87, %v221, 2147483647
  %vm278 = vcmp.lt.s32.totalorder %v267, %v277
  %v279 = vsel %vm278, %v267, %v277
  %v280 = vsel %vm87, %v222, 2147483647
  %vm281 = vcmp.lt.s32.totalorder %v270, %v280
  %v282 = vsel %vm281, %v270, %v280
  %v283 = vsel %vm87, %v223, 2147483647
  %vm284 = vcmp.lt.s32.totalorder %v273, %v283
  %v285 = vsel %vm284, %v273, %v283
  %v286 = vsel %vm87, %v224, 2147483647
  %vm287 = vcmp.lt.s32.totalorder %v276, %v286
  %v288 = vsel %vm287, %v276, %v286
  %v289 = vsel %vm87, %v225, 2147483647
  %vm290 = vcmp.lt.s32.totalorder %v279, %v289
  %v291 = vsel %vm290, %v279, %v289
  %v292 = vsel %vm87, %v226, 2147483647
  %vm293 = vcmp.lt.s32.totalorder %v282, %v292
  %v294 = vsel %vm293, %v282, %v292
  %v295 = vsel %vm87, %v227, 2147483647
  %vm296 = vcmp.lt.s32.totalorder %v285, %v295
  %v297 = vsel %vm296, %v285, %v295
  %v298 = vsel %vm87, %v228, 2147483647
  %vm299 = vcmp.lt.s32.totalorder %v288, %v298
  %v300 = vsel %vm299, %v288, %v298
  %v301 = vsel %vm87, %v229, 2147483647
  %vm302 = vcmp.lt.s32.totalorder %v291, %v301
  %v303 = vsel %vm302, %v291, %v301
  %v304 = vsel %vm87, %v230, 2147483647
  %vm305 = vcmp.lt.s32.totalorder %v294, %v304
  %v306 = vsel %vm305, %v294, %v304
  %v307 = vsel %vm87, %v231, 2147483647
  %vm308 = vcmp.lt.s32.totalorder %v297, %v307
  %v309 = vsel %vm308, %v297, %v307
  %v310 = vsel %vm87, %v232, 2147483647
  %vm311 = vcmp.lt.s32.totalorder %v300, %v310
  %v312 = vsel %vm311, %v300, %v310
  %v313 = vsel %vm87, %v233, 2147483647
  %vm314 = vcmp.lt.s32.totalorder %v303, %v313
  %v315 = vsel %vm314, %v303, %v313
  %v316 = vsel %vm87, %v234, 2147483647
  %vm317 = vcmp.lt.s32.totalorder %v306, %v316
  %v318 = vsel %vm317, %v306, %v316
  %v319 = vsel %vm87, %v235, 2147483647
  %vm320 = vcmp.lt.s32.totalorder %v309, %v319
  %v321 = vsel %vm320, %v309, %v319
  %v322 = vsel %vm87, %v236, 2147483647
  %vm323 = vcmp.lt.s32.totalorder %v312, %v322
  %v324 = vsel %vm323, %v312, %v322
  %v325 = vsel %vm87, %v237, 2147483647
  %vm326 = vcmp.lt.s32.totalorder %v315, %v325
  %v327 = vsel %vm326, %v315, %v325
  %v328 = vsel %vm87, %v238, 2147483647
  %vm329 = vcmp.lt.s32.totalorder %v318, %v328
  %v330 = vsel %vm329, %v318, %v328
  %v331 = vsel %vm87, %v239, 2147483647
  %vm332 = vcmp.lt.s32.totalorder %v321, %v331
  %v333 = vsel %vm332, %v321, %v331
  %v334 = vsel %vm87, %v240, 2147483647
  %vm335 = vcmp.lt.s32.totalorder %v324, %v334
  %v336 = vsel %vm335, %v324, %v334
  %v337 = vsel %vm87, %v241, 2147483647
  %vm338 = vcmp.lt.s32.totalorder %v327, %v337
  %v339 = vsel %vm338, %v327, %v337
  %v340 = vsel %vm87, %v242, 2147483647
  %vm341 = vcmp.lt.s32.totalorder %v330, %v340
  %v342 = vsel %vm341, %v330, %v340
  %v343 = vsel %vm87, %v243, 2147483647
  %vm344 = vcmp.lt.s32.totalorder %v333, %v343
  %v345 = vsel %vm344, %v333, %v343
  %v346 = vsel %vm87, %v244, 2147483647
  %vm347 = vcmp.lt.s32.totalorder %v336, %v346
  %v348 = vsel %vm347, %v336, %v346
  %v349 = vsel %vm158, %v245, 2147483647
  %vm350 = vcmp.lt.s32.totalorder %v339, %v349
  %v351 = vsel %vm350, %v339, %v349
  %vm352 = vcmp.lt.s32.totalorder %v348, %v351
  %v353 = vsel %vm352, %v348, %v351
  %vm354 = vcmp.lt.s32.totalorder %v342, %v345
  %v355 = vsel %vm354, %v342, %v345
  %vm356 = vcmp.lt.s32.totalorder %v353, %v355
  %v357 = vsel %vm356, %v353, %v355
  %v358 = vrot.slane %v357, 4
  %vm359 = vcmp.lt.s32.totalorder %v357, %v358
  %v360 = vsel %vm359, %v357, %v358
  %v361 = vrot.slane %v360, 2
  %vm362 = vcmp.lt.s32.totalorder %v360, %v361
  %v363 = vsel %vm362, %v360, %v361
  %v364 = vrot.slane %v363, 1
  %vm365 = vcmp.lt.s32.totalorder %v363, %v364
  %v366 = vsel %vm365, %v363, %v364
  %vm367 = vcmp.eq.s32.totalorder %v49, %v366
  %vm368 = vcmp.eq.s32.totalorder %v50, %v366
  %vm369 = vcmp.eq.s32.totalorder %v51, %v366
  %vm370 = vcmp.eq.s32.totalorder %v52, %v366
  %vm371 = vcmp.eq.s32.totalorder %v53, %v366
  %vm372 = vcmp.eq.s32.totalorder %v54, %v366
  %vm373 = vcmp.eq.s32.totalorder %v55, %v366
  %vm374 = vcmp.eq.s32.totalorder %v56, %v366
  %vm375 = vcmp.eq.s32.totalorder %v57, %v366
  %vm376 = vcmp.eq.s32.totalorder %v58, %v366
  %vm377 = vcmp.eq.s32.totalorder %v59, %v366
  %vm378 = vcmp.eq.s32.totalorder %v60, %v366
  %vm379 = vcmp.eq.s32.totalorder %v61, %v366
  %vm380 = vcmp.eq.s32.totalorder %v62, %v366
  %vm381 = vcmp.eq.s32.totalorder %v63, %v366
  %vm382 = vcmp.eq.s32.totalorder %v64, %v366
  %vm383 = vcmp.eq.s32.totalorder %v65, %v366
  %vm384 = vcmp.eq.s32.totalorder %v66, %v366
  %vm385 = vcmp.eq.s32.totalorder %v67, %v366
  %vm386 = vcmp.eq.s32.totalorder %v68, %v366
  %vm387 = vcmp.eq.s32.totalorder %v69, %v366
  %vm388 = vcmp.eq.s32.totalorder %v70, %v366
  %vm389 = vcmp.eq.s32.totalorder %v71, %v366
  %vm390 = vcmp.eq.s32.totalorder %v72, %v366
  %vm391 = vcmp.eq.s32.totalorder %v73, %v366
  %vm392 = vcmp.eq.s32.totalorder %v74, %v366
  %vm393 = vcmp.eq.s32.totalorder %v75, %v366
  %vm394 = vcmp.eq.s32.totalorder %v76, %v366
  %vm395 = vcmp.eq.s32.totalorder %v77, %v366
  %vm396 = vcmp.eq.s32.totalorder %v78, %v366
  %vm397 = vcmp.eq.s32.totalorder %v79, %v366
  %vm398 = vcmp.eq.s32.totalorder %v80, %v366
  %vm399 = vcmp.eq.s32.totalorder %v81, %v366
  %vm400 = vcmp.eq.s32.totalorder %v82, %v366
  %vm401 = vcmp.eq.s32.totalorder %v83, %v366
  %vm402 = vcmp.eq.s32.totalorder %v84, %v366
  %vm403 = vcmp.eq.s32.totalorder %v85, %v366
  %vm404 = vcmp.eq.s32.totalorder %v86, %v366
  %vm405 = vcmp.gt.f32.partialorder %v10, 0.3
  %vm406 = vcmp.gt.f32.partialorder %v11, 0.3
  %vm407 = vcmp.gt.f32.partialorder %v12, 0.3
  %vm408 = vcmp.gt.f32.partialorder %v13, 0.3
  %vm409 = vcmp.gt.f32.partialorder %v14, 0.3
  %vm410 = vcmp.gt.f32.partialorder %v15, 0.3
  %vm411 = vcmp.gt.f32.partialorder %v16, 0.3
  %vm412 = vcmp.gt.f32.partialorder %v17, 0.3
  %vm413 = vcmp.gt.f32.partialorder %v18, 0.3
  %vm414 = vcmp.gt.f32.partialorder %v19, 0.3
  %vm415 = vcmp.gt.f32.partialorder %v20, 0.3
  %vm416 = vcmp.gt.f32.partialorder %v21, 0.3
  %vm417 = vcmp.gt.f32.partialorder %v22, 0.3
  %vm418 = vcmp.gt.f32.partialorder %v23, 0.3
  %vm419 = vcmp.gt.f32.partialorder %v24, 0.3
  %vm420 = vcmp.gt.f32.partialorder %v25, 0.3
  %vm421 = vcmp.gt.f32.partialorder %v26, 0.3
  %vm422 = vcmp.gt.f32.partialorder %v27, 0.3
  %vm423 = vcmp.gt.f32.partialorder %v28, 0.3
  %vm424 = vcmp.gt.f32.partialorder %v29, 0.3
  %vm425 = vcmp.gt.f32.partialorder %v30, 0.3
  %vm426 = vcmp.gt.f32.partialorder %v31, 0.3
  %vm427 = vcmp.gt.f32.partialorder %v32, 0.3
  %vm428 = vcmp.gt.f32.partialorder %v33, 0.3
  %vm429 = vcmp.gt.f32.partialorder %v34, 0.3
  %vm430 = vcmp.gt.f32.partialorder %v35, 0.3
  %vm431 = vcmp.gt.f32.partialorder %v36, 0.3
  %vm432 = vcmp.gt.f32.partialorder %v37, 0.3
  %vm433 = vcmp.gt.f32.partialorder %v38, 0.3
  %vm434 = vcmp.gt.f32.partialorder %v39, 0.3
  %vm435 = vcmp.gt.f32.partialorder %v40, 0.3
  %vm436 = vcmp.gt.f32.partialorder %v41, 0.3
  %vm437 = vcmp.gt.f32.partialorder %v42, 0.3
  %vm438 = vcmp.gt.f32.partialorder %v43, 0.3
  %vm439 = vcmp.gt.f32.partialorder %v44, 0.3
  %vm440 = vcmp.gt.f32.partialorder %v45, 0.3
  %vm441 = vcmp.gt.f32.partialorder %v46, 0.3
  %vm442 = vcmp.gt.f32.partialorder %v47, 0.3
  %vm443 = vmor %vm405, %vm367
  %vm444 = vmor %vm406, %vm368
  %vm445 = vmor %vm407, %vm369
  %vm446 = vmor %vm408, %vm370
  %vm447 = vmor %vm409, %vm371
  %vm448 = vmor %vm410, %vm372
  %vm449 = vmor %vm411, %vm373
  %vm450 = vmor %vm412, %vm374
  %vm451 = vmor %vm413, %vm375
  %vm452 = vmor %vm414, %vm376
  %vm453 = vmor %vm415, %vm377
  %vm454 = vmor %vm416, %vm378
  %vm455 = vmor %vm417, %vm379
  %vm456 = vmor %vm418, %vm380
  %vm457 = vmor %vm419, %vm381
  %vm458 = vmor %vm420, %vm382
  %vm459 = vmor %vm421, %vm383
  %vm460 = vmor %vm422, %vm384
  %vm461 = vmor %vm423, %vm385
  %vm462 = vmor %vm424, %vm386
  %vm463 = vmor %vm425, %vm387
  %vm464 = vmor %vm426, %vm388
  %vm465 = vmor %vm427, %vm389
  %vm466 = vmor %vm428, %vm390
  %vm467 = vmor %vm429, %vm391
  %vm468 = vmor %vm430, %vm392
  %vm469 = vmor %vm431, %vm393
  %vm470 = vmor %vm432, %vm394
  %vm471 = vmor %vm433, %vm395
  %vm472 = vmor %vm434, %vm396
  %vm473 = vmor %vm435, %vm397
  %vm474 = vmor %vm436, %vm398
  %vm475 = vmor %vm437, %vm399
  %vm476 = vmor %vm438, %vm400
  %vm477 = vmor %vm439, %vm401
  %vm478 = vmor %vm440, %vm402
  %vm479 = vmor %vm441, %vm403
  %vm480 = vmor %vm442, %vm404
  %vm481 = vmpackc.low %vm444, %vm443
  %vm482 = vmpackc.low %vm446, %vm445
  %vm483 = vmpackc.even %vm482, %vm481
  %vm484 = vmpackc.low %vm448, %vm447
  %vm485 = vmpackc.low %vm450, %vm449
  %vm486 = vmpackc.even %vm485, %vm484
  %vm487 = vmpackc.low %vm452, %vm451
  %vm488 = vmpackc.low %vm454, %vm453
  %vm489 = vmpackc.even %vm488, %vm487
  %vm490 = vmpackc.low %vm456, %vm455
  %vm491 = vmpackc.low %vm458, %vm457
  %vm492 = vmpackc.even %vm491, %vm490
  %vm493 = vmpackc.low %vm460, %vm459
  %vm494 = vmpackc.low %vm462, %vm461
  %vm495 = vmpackc.even %vm494, %vm493
  %vm496 = vmpackc.low %vm464, %vm463
  %vm497 = vmpackc.low %vm466, %vm465
  %vm498 = vmpackc.even %vm497, %vm496
  %vm499 = vmpackc.low %vm468, %vm467
  %vm500 = vmpackc.low %vm470, %vm469
  %vm501 = vmpackc.even %vm500, %vm499
  %vm502 = vmpackc.low %vm472, %vm471
  %vm503 = vmpackc.low %vm474, %vm473
  %vm504 = vmpackc.even %vm503, %vm502
  %vm505 = vmpackc.low %vm476, %vm475
  %vm506 = vmpackc.low %vm478, %vm477
  %vm507 = vmpackc.even %vm506, %vm505
  %vm508 = vmpackc.low %vm480, %vm479
  %vm509 = vmpackc.even %vm508, %vm508
  %v510 = vsel %vm483, 16843009, 0
  %v511 = vsel %vm486, 16843009, 0
  %v512 = vsel %vm489, 16843009, 0
  %v513 = vsel %vm492, 16843009, 0
  %v514 = vsel %vm495, 16843009, 0
  %v515 = vsel %vm498, 16843009, 0
  %v516 = vsel %vm501, 16843009, 0
  %v517 = vsel %vm504, 16843009, 0
  %v518 = vsel %vm507, 16843009, 0
  %v519 = vsel %vm509, 16843009, 0
  %v520 = vunpack.c.0.s8 %v510
  %v521 = vunpack.c.1.s8 %v510
  %v522 = vunpack.c.2.s8 %v510
  %v523 = vunpack.c.3.s8 %v510
  %v524 = vunpack.c.0.s8 %v511
  %v525 = vunpack.c.1.s8 %v511
  %v526 = vunpack.c.2.s8 %v511
  %v527 = vunpack.c.3.s8 %v511
  %v528 = vunpack.c.0.s8 %v512
  %v529 = vunpack.c.1.s8 %v512
  %v530 = vunpack.c.2.s8 %v512
  %v531 = vunpack.c.3.s8 %v512
  %v532 = vunpack.c.0.s8 %v513
  %v533 = vunpack.c.1.s8 %v513
  %v534 = vunpack.c.2.s8 %v513
  %v535 = vunpack.c.3.s8 %v513
  %v536 = vunpack.c.0.s8 %v514
  %v537 = vunpack.c.1.s8 %v514
  %v538 = vunpack.c.2.s8 %v514
  %v539 = vunpack.c.3.s8 %v514
  %v540 = vunpack.c.0.s8 %v515
  %v541 = vunpack.c.1.s8 %v515
  %v542 = vunpack.c.2.s8 %v515
  %v543 = vunpack.c.3.s8 %v515
  %v544 = vunpack.c.0.s8 %v516
  %v545 = vunpack.c.1.s8 %v516
  %v546 = vunpack.c.2.s8 %v516
  %v547 = vunpack.c.3.s8 %v516
  %v548 = vunpack.c.0.s8 %v517
  %v549 = vunpack.c.1.s8 %v517
  %v550 = vunpack.c.2.s8 %v517
  %v551 = vunpack.c.3.s8 %v517
  %v552 = vunpack.c.0.s8 %v518
  %v553 = vunpack.c.1.s8 %v518
  %v554 = vunpack.c.2.s8 %v518
  %v555 = vunpack.c.3.s8 %v518
  %v556 = vunpack.c.0.s8 %v519
  %v557 = vunpack.c.1.s8 %v519
  %v558 = vpack.c.b16 %v520, %v520
  %v559 = vpack.c.b8 %v558, %v558
  %v560 = vpack.c.b16 %v521, %v521
  %v561 = vpack.c.b8 %v560, %v560
  %v562 = vpack.c.b16 %v522, %v522
  %v563 = vpack.c.b8 %v562, %v562
  %v564 = vpack.c.b16 %v523, %v523
  %v565 = vpack.c.b8 %v564, %v564
  %v566 = vpack.c.b16 %v524, %v524
  %v567 = vpack.c.b8 %v566, %v566
  %v568 = vpack.c.b16 %v525, %v525
  %v569 = vpack.c.b8 %v568, %v568
  %v570 = vpack.c.b16 %v526, %v526
  %v571 = vpack.c.b8 %v570, %v570
  %v572 = vpack.c.b16 %v527, %v527
  %v573 = vpack.c.b8 %v572, %v572
  %v574 = vpack.c.b16 %v528, %v528
  %v575 = vpack.c.b8 %v574, %v574
  %v576 = vpack.c.b16 %v529, %v529
  %v577 = vpack.c.b8 %v576, %v576
  %v578 = vpack.c.b16 %v530, %v530
  %v579 = vpack.c.b8 %v578, %v578
  %v580 = vpack.c.b16 %v531, %v531
  %v581 = vpack.c.b8 %v580, %v580
  %v582 = vpack.c.b16 %v532, %v532
  %v583 = vpack.c.b8 %v582, %v582
  %v584 = vpack.c.b16 %v533, %v533
  %v585 = vpack.c.b8 %v584, %v584
  %v586 = vpack.c.b16 %v534, %v534
  %v587 = vpack.c.b8 %v586, %v586
  %v588 = vpack.c.b16 %v535, %v535
  %v589 = vpack.c.b8 %v588, %v588
  %v590 = vpack.c.b16 %v536, %v536
  %v591 = vpack.c.b8 %v590, %v590
  %v592 = vpack.c.b16 %v537, %v537
  %v593 = vpack.c.b8 %v592, %v592
  %v594 = vpack.c.b16 %v538, %v538
  %v595 = vpack.c.b8 %v594, %v594
  %v596 = vpack.c.b16 %v539, %v539
  %v597 = vpack.c.b8 %v596, %v596
  %v598 = vpack.c.b16 %v540, %v540
  %v599 = vpack.c.b8 %v598, %v598
  %v600 = vpack.c.b16 %v541, %v541
  %v601 = vpack.c.b8 %v600, %v600
  %v602 = vpack.c.b16 %v542, %v542
  %v603 = vpack.c.b8 %v602, %v602
  %v604 = vpack.c.b16 %v543, %v543
  %v605 = vpack.c.b8 %v604, %v604
  %v606 = vpack.c.b16 %v544, %v544
  %v607 = vpack.c.b8 %v606, %v606
  %v608 = vpack.c.b16 %v545, %v545
  %v609 = vpack.c.b8 %v608, %v608
  %v610 = vpack.c.b16 %v546, %v546
  %v611 = vpack.c.b8 %v610, %v610
  %v612 = vpack.c.b16 %v547, %v547
  %v613 = vpack.c.b8 %v612, %v612
  %v614 = vpack.c.b16 %v548, %v548
  %v615 = vpack.c.b8 %v614, %v614
  %v616 = vpack.c.b16 %v549, %v549
  %v617 = vpack.c.b8 %v616, %v616
  %v618 = vpack.c.b16 %v550, %v550
  %v619 = vpack.c.b8 %v618, %v618
  %v620 = vpack.c.b16 %v551, %v551
  %v621 = vpack.c.b8 %v620, %v620
  %v622 = vpack.c.b16 %v552, %v552
  %v623 = vpack.c.b8 %v622, %v622
  %v624 = vpack.c.b16 %v553, %v553
  %v625 = vpack.c.b8 %v624, %v624
  %v626 = vpack.c.b16 %v554, %v554
  %v627 = vpack.c.b8 %v626, %v626
  %v628 = vpack.c.b16 %v555, %v555
  %v629 = vpack.c.b8 %v628, %v628
  %v630 = vpack.c.b16 %v556, %v556
  %v631 = vpack.c.b8 %v630, %v630
  %v632 = vpack.c.b16 %v557, %v557
  %v633 = vpack.c.b8 %v632, %v632
  %vm634 = vcmask 582656
  %635 = vst.msk [vmem:[%s1] sm:$0x3] %vm634, %v559
  %636 = vst.msk [vmem:[%s1 + $0x2] sm:$0x3] %vm634, %v561
  %637 = vst.msk [vmem:[%s1 + $0x4] sm:$0x3] %vm634, %v563
  %638 = vst.msk [vmem:[%s1 + $0x6] sm:$0x3] %vm634, %v565
  %639 = vst.msk [vmem:[%s1 + $0x8] sm:$0x3] %vm634, %v567
  %640 = vst.msk [vmem:[%s1 + $0xa] sm:$0x3] %vm634, %v569
  %641 = vst.msk [vmem:[%s1 + $0xc] sm:$0x3] %vm634, %v571
  %642 = vst.msk [vmem:[%s1 + $0xe] sm:$0x3] %vm634, %v573
  %643 = vst.msk [vmem:[%s1 + $0x10] sm:$0x3] %vm634, %v575
  %644 = vst.msk [vmem:[%s1 + $0x12] sm:$0x3] %vm634, %v577
  %645 = vst.msk [vmem:[%s1 + $0x14] sm:$0x3] %vm634, %v579
  %646 = vst.msk [vmem:[%s1 + $0x16] sm:$0x3] %vm634, %v581
  %647 = vst.msk [vmem:[%s1 + $0x18] sm:$0x3] %vm634, %v583
  %648 = vst.msk [vmem:[%s1 + $0x1a] sm:$0x3] %vm634, %v585
  %649 = vst.msk [vmem:[%s1 + $0x1c] sm:$0x3] %vm634, %v587
  %650 = vst.msk [vmem:[%s1 + $0x1e] sm:$0x3] %vm634, %v589
  %651 = vst.msk [vmem:[%s1 + $0x20] sm:$0x3] %vm634, %v591
  %652 = vst.msk [vmem:[%s1 + $0x22] sm:$0x3] %vm634, %v593
  %653 = vst.msk [vmem:[%s1 + $0x24] sm:$0x3] %vm634, %v595
  %654 = vst.msk [vmem:[%s1 + $0x26] sm:$0x3] %vm634, %v597
  %655 = vst.msk [vmem:[%s1 + $0x28] sm:$0x3] %vm634, %v599
  %656 = vst.msk [vmem:[%s1 + $0x2a] sm:$0x3] %vm634, %v601
  %657 = vst.msk [vmem:[%s1 + $0x2c] sm:$0x3] %vm634, %v603
  %658 = vst.msk [vmem:[%s1 + $0x2e] sm:$0x3] %vm634, %v605
  %659 = vst.msk [vmem:[%s1 + $0x30] sm:$0x3] %vm634, %v607
  %660 = vst.msk [vmem:[%s1 + $0x32] sm:$0x3] %vm634, %v609
  %661 = vst.msk [vmem:[%s1 + $0x34] sm:$0x3] %vm634, %v611
  %662 = vst.msk [vmem:[%s1 + $0x36] sm:$0x3] %vm634, %v613
  %663 = vst.msk [vmem:[%s1 + $0x38] sm:$0x3] %vm634, %v615
  %664 = vst.msk [vmem:[%s1 + $0x3a] sm:$0x3] %vm634, %v617
  %665 = vst.msk [vmem:[%s1 + $0x3c] sm:$0x3] %vm634, %v619
  %666 = vst.msk [vmem:[%s1 + $0x3e] sm:$0x3] %vm634, %v621
  %667 = vst.msk [vmem:[%s1 + $0x40] sm:$0x3] %vm634, %v623
  %668 = vst.msk [vmem:[%s1 + $0x42] sm:$0x3] %vm634, %v625
  %669 = vst.msk [vmem:[%s1 + $0x44] sm:$0x3] %vm634, %v627
  %670 = vst.msk [vmem:[%s1 + $0x46] sm:$0x3] %vm634, %v629
  %671 = vst.msk [vmem:[%s1 + $0x48] sm:$0x3] %vm634, %v631
  %vm672 = vcmask 581632
  %673 = vst.msk [vmem:[%s1 + $0x4a] sm:$0x1] %vm672, %v633
  // Predicated region
  $region6: #{tpu_custom_call.1} parent=0 // pred_check
    _
  $region7: #{tpu_custom_call.1} parent=0 // pred_check_branch
    %675 = sbr.rel (0) target = $region9
  $region8: #{tpu_custom_call.1} parent=0 // pred_region
    _
  $region9: #{tpu_custom_call.1} parent=0 // pred_fallthru
    _
  // Predicated region
  $region10: #{tpu_custom_call.1} parent=0 // pred_check
    _
  $region11: #{tpu_custom_call.1} parent=0 // pred_check_branch
    %677 = sbr.rel (0) target = $region13
  $region12: #{tpu_custom_call.1} parent=0 // pred_region
    _
  $region13: #{tpu_custom_call.1} parent=0 // pred_fallthru
    _

</llo_original>
